<compile_context>
chip_gen: v7x
topology: tpu7x:2x2x1
jax: 0.10.0
libtpu: 0.0.40
codegen_flags: <defaults>
</compile_context>

<pallas_src>
import jax
import jax.numpy as jnp
from jax import lax
from jax.experimental import pallas as pl
from jax.experimental.pallas import tpu as pltpu


def _patch_embed_kernel(bias_ref, a_ref, bsel_ref, o_ref):
    # bias_ref: (1,)      f32 in SMEM  -- conv bias scalar
    # a_ref:    (tm, K)   in VMEM      -- image strip rows (one per (n, patch-row))
    # bsel_ref: (K, Wp)   in VMEM      -- constant patch-selection/weight matrix
    # o_ref:    (tm, Wp)  in VMEM      -- patch embeddings for this row tile
    acc = jnp.dot(a_ref[...], bsel_ref[...], preferred_element_type=jnp.float32)
    o_ref[...] = (acc + bias_ref[0]).astype(o_ref.dtype)


def img_patches_forward(img, weight, bias, patch_size=4, target_block_bytes=2 << 20):
    """Equivalent of ImgPatches.forward.

    img:    (N, 1, H, W) float32  (NCHW, like the PyTorch module)
    weight: (1, 1, P, P) float32  (OIHW conv weight)
    bias:   (1,)         float32
    returns (N, 1, L) with L = (H//P) * (W//P)
    """
    N, C, H, W = img.shape
    P = patch_size
    assert C == 1 and H % P == 0 and W % P == 0
    Hp, Wp = H // P, W // P
    L = Hp * Wp
    K = P * W       # contraction length: one full strip of P image rows
    R = N * Hp      # one matmul row per (batch, patch-row)

    # A: (N,1,H,W) -> (N*Hp, P*W).  Contiguous split of H into (Hp, P): FREE.
    a = img.reshape(R, K)

    # B: constant patch-selection matrix, B[p*W + j*P + q, j] = w[p, q].
    w2 = weight.reshape(P, P).astype(jnp.float32)
    eye = jnp.eye(Wp, dtype=jnp.float32)
    # (p, j, q, j') -> row index p*(Wp*P) + j*P + q = p*W + j*P + q, col j'.
    bsel = jnp.einsum("pq,jk->pjqk", w2, eye).reshape(K, Wp)

    b_scalar = bias.reshape(1).astype(jnp.float32)

    # Row-tile selection: multiple of 8 (sublane rule), <= ~2 MiB of input per
    # block, and >= 2 grid steps whenever R allows it (v7x megacore sharding).
    if R <= 8:
        tm = R                                   # single full-extent block
    else:
        budget = max(8, (target_block_bytes // (K * 4)) // 8 * 8)
        half = -(-R // 2)                        # cdiv(R, 2)
        half = -(-half // 8) * 8                 # round up to multiple of 8
        tm = max(8, min(budget, half))
    grid = (pl.cdiv(R, tm),)                     # ragged last tile is masked

    out = pl.pallas_call(
        _patch_embed_kernel,
        out_shape=jax.ShapeDtypeStruct((R, Wp), img.dtype),
        grid=grid,
        in_specs=[
            pl.BlockSpec(memory_space=pltpu.MemorySpace.SMEM),   # bias scalar
            pl.BlockSpec((tm, K), lambda r: (r, 0)),             # image strips
            pl.BlockSpec((K, Wp), lambda r: (0, 0)),             # constant B (resident)
        ],
        out_specs=pl.BlockSpec((tm, Wp), lambda r: (r, 0)),
        compiler_params=pltpu.CompilerParams(
            dimension_semantics=("parallel",)),
    )(b_scalar, a, bsel)

    # (N*Hp, Wp) -> (N, 1, Hp*Wp): free reshape, matches PyTorch flatten(2).
    return out.reshape(N, 1, L)


def _reference(img, weight, bias, P):
    conv = lax.conv_general_dilated(
        img, weight, window_strides=(P, P), padding="VALID",
        dimension_numbers=("NCHW", "OIHW", "NCHW"))
    return (conv + bias.reshape(1, 1, 1, 1)).reshape(img.shape[0], 1, -1)


if __name__ == "__main__":
    key = jax.random.PRNGKey(0)
    k_img, k_w, k_b, k_img2, k_img3 = jax.random.split(key, 5)

    P = 4
    # Deterministic synthetic parameters (shapes from nn.Conv2d(1, 1, 4, 4)).
    weight = jax.random.normal(k_w, (1, 1, P, P), dtype=jnp.float32) * 0.25
    bias = jax.random.normal(k_b, (1,), dtype=jnp.float32) * 0.1

    # Main case: batch=2, 1 channel, 16x16 image (single full-extent tile).
    x = jax.random.normal(k_img, (2, 1, 16, 16), dtype=jnp.float32)
    out = jax.block_until_ready(img_patches_forward(x, weight, bias, patch_size=P))
    ref = _reference(x, weight, bias, P)
    assert out.shape == ref.shape == (2, 1, 16)
    assert jnp.allclose(out, ref, atol=1e-5, rtol=1e-5)

    # Multi-tile path (R = 16 rows -> 2 grid steps).
    x2 = jax.random.normal(k_img2, (2, 1, 32, 32), dtype=jnp.float32)
    out2 = jax.block_until_ready(img_patches_forward(x2, weight, bias, patch_size=P))
    ref2 = _reference(x2, weight, bias, P)
    assert out2.shape == ref2.shape == (2, 1, 64)
    assert jnp.allclose(out2, ref2, atol=1e-5, rtol=1e-5)

    # Ragged-tile path (R = 15 rows -> 2 grid steps, masked last tile).
    x3 = jax.random.normal(k_img3, (3, 1, 20, 20), dtype=jnp.float32)
    out3 = jax.block_until_ready(img_patches_forward(x3, weight, bias, patch_size=P))
    ref3 = _reference(x3, weight, bias, P)
    assert out3.shape == ref3.shape == (3, 1, 25)
    assert jnp.allclose(out3, ref3, atol=1e-5, rtol=1e-5)

    print("KERNEL_OK")
</pallas_src>

<mosaic_0001>
module attributes {stable_mosaic.version = 11 : i64} {
  func.func @_patch_embed_kernel(%arg0: i32, %arg1: memref<1xf32, #tpu.memory_space<smem>>, %arg2: memref<8x64xf32, #tpu.memory_space<vmem>>, %arg3: memref<64x4xf32, #tpu.memory_space<vmem>>, %arg4: memref<8x4xf32, #tpu.memory_space<vmem>>) attributes {dimension_semantics = [#tpu.dimension_semantics<parallel>], iteration_bounds = array<i64: 1>, scalar_prefetch = 0 : i64, scratch_operands = 0 : i64, tpu.core_type = #tpu.core_type<tc>, window_params = [{transform_indices = @transform_0, window_bounds = array<i64: 1>}, {transform_indices = @transform_1, window_bounds = array<i64: 8, 64>}, {pipeline_mode = #tpu.pipeline_mode<synchronous>, transform_indices = @transform_2, window_bounds = array<i64: 64, 4>}, {transform_indices = @transform_3, window_bounds = array<i64: 8, 4>}]} {
    %c0 = arith.constant 0 : index
    %c0_0 = arith.constant 0 : index
    %0 = vector.load %arg2[%c0, %c0_0] : memref<8x64xf32, #tpu.memory_space<vmem>>, vector<8x64xf32>
    %c0_1 = arith.constant 0 : index
    %c0_2 = arith.constant 0 : index
    %1 = vector.load %arg3[%c0_1, %c0_2] : memref<64x4xf32, #tpu.memory_space<vmem>>, vector<64x4xf32>
    %cst = arith.constant dense<0.000000e+00> : vector<8x4xf32>
    %2 = tpu.matmul %0, %1, %cst {dimension_numbers = #tpu.dot_dimension_numbers<[1], [0], [0], [1], [0, 0, 1, 1], [], []>} : vector<8x64xf32>, vector<64x4xf32>, vector<8x4xf32> -> vector<8x4xf32>
    %c0_3 = arith.constant 0 : index
    %3 = memref.load %arg1[%c0_3] : memref<1xf32, #tpu.memory_space<smem>>
    %4 = vector.broadcast %3 : f32 to vector<8x4xf32>
    %5 = arith.addf %2, %4 : vector<8x4xf32>
    %c0_4 = arith.constant 0 : index
    %c0_5 = arith.constant 0 : index
    %6 = vector.load %arg4[%c0_4, %c0_5] : memref<8x4xf32, #tpu.memory_space<vmem>>, vector<8x4xf32>
    tpu.vector_store %arg4[%c0_4, %c0_5], %5 {strides = array<i32>} : memref<8x4xf32, #tpu.memory_space<vmem>>, vector<8x4xf32>,
    return
  }
  func.func @transform_0(%arg0: i32) -> i32 {
    %c0_i32 = arith.constant 0 : i32
    %c0_i32_0 = arith.constant 0 : i32
    return %c0_i32 : i32
  }
  func.func @transform_1(%arg0: i32) -> (i32, i32) {
    %c0_i32 = arith.constant 0 : i32
    %c0_i32_0 = arith.constant 0 : i32
    return %arg0, %c0_i32 : i32, i32
  }
  func.func @transform_2(%arg0: i32) -> (i32, i32) {
    %c0_i32 = arith.constant 0 : i32
    %c0_i32_0 = arith.constant 0 : i32
    %c0_i32_1 = arith.constant 0 : i32
    return %c0_i32, %c0_i32_0 : i32, i32
  }
  func.func @transform_3(%arg0: i32) -> (i32, i32) {
    %c0_i32 = arith.constant 0 : i32
    %c0_i32_0 = arith.constant 0 : i32
    return %arg0, %c0_i32 : i32, i32
  }
}

</mosaic_0001>

<llo_original>
// kernel: tpu_custom_call.1
$region0: #{tpu_custom_call.1}
  #allocation0 [shape = 'u32[]', space=smem, size = 0x4, offset = 0x4, fixed_abs, tag = 'smem constant byte address 0x4 - core index']
  #allocation1 [shape = 'u32[144,128]{1,0:T(1,128)}', space=vmem, size = 0x12000, scoped, tag = 'internal scratch']
  #allocation2 [shape = 'f32[1]{0:T(128)S(6)}', space=smem, size = 0x200, scoped, tag = 'scoped memory for tpu_custom_call.1']
  %s0 = inlined_call_operand.<no memory space> [shape: f32[1], index: 0, kind: input, shape index: {}]
  %s1 = inlined_call_operand.vmem [shape: f32[8,64], index: 1, kind: input, shape index: {}]
  %s2 = inlined_call_operand.vmem [shape: f32[64,4], index: 2, kind: input, shape index: {}]
  %s3 = inlined_call_operand.vmem [shape: f32[8,4], index: 3, kind: output, shape index: {}]
  %s4 = sld [smem:[#allocation0]]
  $region22: #{tpu_custom_call.1} parent=0
    _
  %s6 = ssub.s32 1, %s4
  %s7 = scalar_select 0, %s6, %s4
  %8 = sst [smem:[#allocation2]] %s0
  // Predicated region
  $region2: #{tpu_custom_call.1} parent=0 // pred_check
    _
  $region3: #{tpu_custom_call.1} parent=0 // pred_check_branch
    %10 = sbr.rel (0) target = $region5
  $region4: #{tpu_custom_call.1} parent=0 // pred_region
    _
  $region5: #{tpu_custom_call.1} parent=0 // pred_fallthru
    _
  // Predicated region
  $region6: #{tpu_custom_call.1} parent=0 // pred_check
    _
  $region7: #{tpu_custom_call.1} parent=0 // pred_check_branch
    %12 = sbr.rel (0) target = $region9
  $region8: #{tpu_custom_call.1} parent=0 // pred_region
    _
  $region9: #{tpu_custom_call.1} parent=0 // pred_fallthru
    _
  // Predicated region
  $region10: #{tpu_custom_call.1} parent=0 // pred_check
    _
  $region11: #{tpu_custom_call.1} parent=0 // pred_check_branch
    %14 = sbr.rel (0) target = $region13
  $region12: #{tpu_custom_call.1} parent=0 // pred_region
    _
  $region13: #{tpu_custom_call.1} parent=0 // pred_fallthru
    _
  %v15 = vld [vmem:[%s1] sm:$0xff]
  %v16 = vld [vmem:[%s2] sm:$0xff]
  %v17 = vld [vmem:[%s2 + $0x8] sm:$0xff]
  %v18 = vld [vmem:[%s2 + $0x10] sm:$0xff]
  %v19 = vld [vmem:[%s2 + $0x18] sm:$0xff]
  %v20 = vld [vmem:[%s2 + $0x20] sm:$0xff]
  %v21 = vld [vmem:[%s2 + $0x28] sm:$0xff]
  %v22 = vld [vmem:[%s2 + $0x30] sm:$0xff]
  %v23 = vld [vmem:[%s2 + $0x38] sm:$0xff]
  %s24 = sld [smem:[#allocation2]]
  %v25 = vstv %s24
  %vm26 = vcmask 523264
  %v28 = vsel %vm26, %v15, 0
  %30 = vmatprep.subr.mxu0 0.0
  %31 = vmatpush1.msra.mxu0 %v16
  %32 = vmatprep.subr.mxu0 0.0
  %33 = vmatpush1.msra.mxu0 %v17
  %34 = vmatprep.subr.mxu0 0.0
  %35 = vmatpush1.msra.mxu0 %v18
  %36 = vmatprep.subr.mxu0 0.0
  %37 = vmatpush1.msra.mxu0 %v19
  %38 = vmatprep.subr.mxu0 0.0
  %39 = vmatpush1.msra.mxu0 %v20
  %40 = vmatprep.subr.mxu0 0.0
  %41 = vmatpush1.msra.mxu0 %v21
  %42 = vmatprep.subr.mxu0 0.0
  %43 = vmatpush1.msra.mxu0 %v22
  %44 = vmatprep.subr.mxu0 0.0
  %45 = vmatpush1.msra.mxu0 %v23
  %46 = vmatprep.subr.mxu0 0.0
  %47 = vmatpush1.msra.mxu0 0.0
  %48 = vmatprep.subr.mxu0 0.0
  %49 = vmatpush1.msra.mxu0 0.0
  %50 = vmatprep.subr.mxu0 0.0
  %51 = vmatpush1.msra.mxu0 0.0
  %52 = vmatprep.subr.mxu0 0.0
  %53 = vmatpush1.msra.mxu0 0.0
  %54 = vmatprep.subr.mxu0 0.0
  %55 = vmatpush1.msra.mxu0 0.0
  %56 = vmatprep.subr.mxu0 0.0
  %57 = vmatpush1.msra.mxu0 0.0
  %58 = vmatprep.subr.mxu0 0.0
  %59 = vmatpush1.msra.mxu0 0.0
  %60 = vmatprep.subr.mxu0 0.0
  %61 = vmatpush1.msra.mxu0 0.0
  %62 = vmatprep.subr.mxu0 0.0
  %63 = vmatpush1.msra.mxu0 0.0
  %64 = vmatprep.subr.mxu0 0.0
  %65 = vmatpush1.msra.mxu0 0.0
  %66 = vmatprep.subr.mxu0 0.0
  %67 = vmatpush1.msra.mxu0 0.0
  %68 = vmatprep.subr.mxu0 0.0
  %69 = vmatpush1.msra.mxu0 0.0
  %70 = vmatprep.subr.mxu0 0.0
  %71 = vmatpush1.msra.mxu0 0.0
  %72 = vmatprep.subr.mxu0 0.0
  %73 = vmatpush1.msra.mxu0 0.0
  %74 = vmatprep.subr.mxu0 0.0
  %75 = vmatpush1.msra.mxu0 0.0
  %76 = vmatprep.subr.mxu0 0.0
  %77 = vmatpush1.msra.mxu0 0.0
  %78 = vmatprep.subr.mxu0 0.0
  %79 = vmatpush1.msra.mxu0 0.0
  %80 = vmatprep.subr.mxu0 0.0
  %81 = vmatpush1.msra.mxu0 0.0
  %82 = vmatprep.subr.mxu0 0.0
  %83 = vmatpush1.msra.mxu0 0.0
  %84 = vmatprep.subr.mxu0 0.0
  %85 = vmatpush1.msra.mxu0 0.0
  %86 = vmatprep.subr.mxu0 0.0
  %87 = vmatpush1.msra.mxu0 0.0
  %88 = vmatprep.subr.mxu0 0.0
  %89 = vmatpush1.msra.mxu0 0.0
  %90 = vmatprep.subr.mxu0 0.0
  %91 = vmatpush1.msra.mxu0 0.0
  %92 = vmatprep.subr.mxu0 0.0
  %93 = vmatpush1.msra.mxu0 0.0
  %94 = vmatprep.mubr.f32.mxu0 0.0
  %95 = vmatmul.mubr.f32.gmra.mrb[0].mxu0 %v28
  %v96 = vpop.f32.mrb[0].mxu0
  %v97 = vadd.f32 %v25, %v96
  %v98 = vpop.f32.mrb[0].mxu0
  %99 = vdwg.mxu0
  %vm100 = vcmask 31744
  %101 = vst.msk [vmem:[%s3] sm:$0xff] %vm100, %v97
  // Predicated region
  $region14: #{tpu_custom_call.1} parent=0 // pred_check
    _
  $region15: #{tpu_custom_call.1} parent=0 // pred_check_branch
    %103 = sbr.rel (0) target = $region17
  $region16: #{tpu_custom_call.1} parent=0 // pred_region
    _
  $region17: #{tpu_custom_call.1} parent=0 // pred_fallthru
    _
  // Predicated region
  $region18: #{tpu_custom_call.1} parent=0 // pred_check
    _
  $region19: #{tpu_custom_call.1} parent=0 // pred_check_branch
    %105 = sbr.rel (0) target = $region21
  $region20: #{tpu_custom_call.1} parent=0 // pred_region
    _
  $region21: #{tpu_custom_call.1} parent=0 // pred_fallthru
    _

</llo_original>
